<compile_context>
chip_gen: v7x
topology: tpu7x:2x2x1
jax: 0.10.0
libtpu: 0.0.40
codegen_flags: <defaults>
</compile_context>

<pallas_src>
import math

import jax
import jax.numpy as jnp
from jax.experimental import pallas as pl
from jax.experimental.pallas import tpu as pltpu


def _round_up(x, m):
    return (x + m - 1) // m * m


# ----------------------- tiled matmul + bias kernel (MXU) -----------------------

def _matmul_bias_kernel(x_ref, w_ref, b_ref, o_ref):
    # x / w arrive bf16 (cast in the wrapper); f32 accumulation on the MXU.
    o_ref[...] = (jnp.dot(x_ref[...], w_ref[...],
                          preferred_element_type=jnp.float32)
                  + b_ref[...]).astype(o_ref.dtype)


def matmul_bias(x, w, b, *, tile_n=256, tile_v=512):
    """x: (N, K) bf16, w: (K, V) bf16, b: (1, V) f32 -> (N, V) f32.

    Tiled over (N, V); K is kept whole per block.  N / V are padded internally to the
    tile multiples and sliced back, so any shape works.  Tile defaults follow the MXU
    row count; sweep tile_v up to 1024-2048 (and tile_n to 512) on v5e/v6e's 128 MiB
    VMEM, keep ~512 on v7x (64 MiB physical).
    """
    N, K = x.shape
    Kw, V = w.shape
    assert K == Kw
    tn = min(tile_n, _round_up(N, 8))
    tv = min(tile_v, _round_up(V, 128))
    N_pad = _round_up(N, tn)
    V_pad = _round_up(V, tv)
    if N_pad != N:
        x = jnp.pad(x, ((0, N_pad - N), (0, 0)))
    if V_pad != V:
        w = jnp.pad(w, ((0, 0), (0, V_pad - V)))
        b = jnp.pad(b, ((0, 0), (0, V_pad - V)))

    # Double-buffered footprint estimate (+headroom), capped at v7x physical VMEM.
    blk = tn * K * x.dtype.itemsize + K * tv * w.dtype.itemsize + tn * tv * 4 + tv * 4
    vmem_limit = int(min(64 << 20, max(4 * blk, 16 << 20)))

    out = pl.pallas_call(
        _matmul_bias_kernel,
        out_shape=jax.ShapeDtypeStruct((N_pad, V_pad), jnp.float32),
        grid=(N_pad // tn, V_pad // tv),
        in_specs=[
            pl.BlockSpec((tn, K), lambda i, j: (i, 0)),
            pl.BlockSpec((K, tv), lambda i, j: (0, j)),
            pl.BlockSpec((1, tv), lambda i, j: (0, j)),
        ],
        out_specs=pl.BlockSpec((tn, tv), lambda i, j: (i, j)),
        compiler_params=pltpu.CompilerParams(
            dimension_semantics=("parallel", "parallel"),
            vmem_limit_bytes=vmem_limit),
    )(x, w, b)
    if N_pad != N or V_pad != V:
        out = out[:N, :V]
    return out


# -------------------- fused multi-layer GRU recurrence kernel --------------------

def _make_fused_gru_kernel(num_layers, hidden_size, unroll):
    L, H = num_layers, hidden_size

    def kernel(gi0_ref, h0_ref, wih_ref, whh_ref, bih_ref, bhh_ref, y_ref, *scratch):
        if L > 1:
            h_carry, x_s, gi_s = scratch
        else:
            (h_carry,) = scratch
        Tc = gi0_ref.shape[0]

        # (Re)initialize the per-layer hidden carry at the first T-chunk.  Every layer
        # starts from the same h0 (hidden.unsqueeze(0).repeat(L, 1, 1) in PyTorch).
        @pl.when(pl.program_id(1) == 0)
        def _():
            for l in range(L):
                h_carry[l] = h0_ref[...]

        def run_layer(l, gi_src, out_dst):
            w_hh = whh_ref[l]              # (H, 3H) bf16, resident across all Tc steps
            b_hh = bhh_ref[l]              # (1, 3H) f32

            def step(t, h_prev):           # h_prev lives in vregs (fori_loop carry)
                gi_t = gi_src[t]           # (Bc, 3H) f32
                gh = jnp.dot(h_prev.astype(jnp.bfloat16), w_hh,
                             preferred_element_type=jnp.float32) + b_hh
                # PyTorch gate order (r, z, n).
                r = jax.nn.sigmoid(gi_t[:, 0 * H:1 * H] + gh[:, 0 * H:1 * H])
                z = jax.nn.sigmoid(gi_t[:, 1 * H:2 * H] + gh[:, 1 * H:2 * H])
                n = jnp.tanh(gi_t[:, 2 * H:3 * H] + r * gh[:, 2 * H:3 * H])
                h_new = (1.0 - z) * n + z * h_prev
                out_dst[t] = h_new         # mandatory per-step sequence store only
                return h_new

            h_fin = jax.lax.fori_loop(0, Tc, step, h_carry[l], unroll=unroll)
            h_carry[l] = h_fin             # carried across T-chunks via scratch

        # Layer 0 reads the hoisted gi0 block directly (no VMEM->VMEM copy); the last
        # layer writes straight into the output block (time-major, dense stores).
        run_layer(0, gi0_ref, y_ref if L == 1 else x_s)

        for l in range(1, L):              # static layer loop
            Tcs, Bc, _ = x_s.shape
            # One (Tc*Bc, H) @ (H, 3H) MXU matmul for this layer's input gates instead
            # of Tc tiny per-step matmuls on the serial critical path.
            x_flat = x_s[...].reshape(Tcs * Bc, H).astype(jnp.bfloat16)
            gi = jnp.dot(x_flat, wih_ref[l - 1], preferred_element_type=jnp.float32)
            gi_s[...] = gi.reshape(Tcs, Bc, 3 * H) + bih_ref[l - 1]
            run_layer(l, gi_s, y_ref if l == L - 1 else x_s)

    return kernel


def _fused_gru_vmem_bytes(Tc, Bc, H, L):
    f32, bf16 = 4, 2
    Lm1 = max(L - 1, 1)
    blocks = (Tc * Bc * 3 * H * f32            # gi0 block
              + Tc * Bc * H * f32              # y block
              + Bc * H * f32                   # h0 block
              + Lm1 * H * 3 * H * bf16         # w_ih_rest
              + L * H * 3 * H * bf16           # w_hh
              + Lm1 * 3 * H * f32 + L * 3 * H * f32)
    scratch = L * Bc * H * f32                 # hidden carry
    if L > 1:
        scratch += Tc * Bc * H * f32 + Tc * Bc * 3 * H * f32
    return 2 * blocks + scratch                # x2 for double-buffering


def fused_gru(gi0, h0, w_ih_rest, w_hh, b_ih_rest, b_hh, *,
              t_chunk=None, batch_chunks=None):
    """All GRU layers + time loop, chunked over (batch, time).

    gi0:       (T, B, 3H) f32           precomputed layer-0 input gates (T % t_chunk == 0)
    h0:        (B, H)     f32           initial hidden (shared by every layer)
    w_ih_rest: (max(L-1,1), H, 3H) bf16
    w_hh:      (L, H, 3H) bf16
    b_ih_rest: (max(L-1,1), 1, 3H) f32
    b_hh:      (L, 1, 3H) f32
    returns    (T, B, H)  f32           time-major last-layer outputs
    """
    T, B, H3 = gi0.shape
    H = h0.shape[-1]
    L = w_hh.shape[0]
    assert H3 == 3 * H

    if batch_chunks is None:
        batch_chunks = 2 if (B >= 16 and B % 16 == 0) else 1
    assert B % batch_chunks == 0
    Bc = B // batch_chunks
    assert Bc % 8 == 0, "pad batch to a sublane multiple per chunk"

    if t_chunk is None:
        t_chunk = T if T <= 64 else 64
    assert T % t_chunk == 0
    Tc = t_chunk
    unroll = math.gcd(Tc, 8)                   # moderate unroll; avoids vreg blowup

    Lm1 = max(L - 1, 1)
    scratch = [pltpu.VMEM((L, Bc, H), jnp.float32)]          # per-layer hidden carry
    if L > 1:
        scratch += [pltpu.VMEM((Tc, Bc, H), jnp.float32),    # per-layer output chunk
                    pltpu.VMEM((Tc, Bc, 3 * H), jnp.float32)]  # per-layer input gates

    vmem_limit = int(min(64 << 20, max(2 * _fused_gru_vmem_bytes(Tc, Bc, H, L),
                                       16 << 20)))

    return pl.pallas_call(
        _make_fused_gru_kernel(L, H, unroll),
        out_shape=jax.ShapeDtypeStruct((T, B, H), jnp.float32),
        grid=(batch_chunks, T // Tc),
        in_specs=[
            pl.BlockSpec((Tc, Bc, 3 * H), lambda b, t: (t, b, 0)),
            pl.BlockSpec((Bc, H), lambda b, t: (b, 0)),
            pl.BlockSpec((Lm1, H, 3 * H), lambda b, t: (0, 0, 0)),
            pl.BlockSpec((L, H, 3 * H), lambda b, t: (0, 0, 0)),
            pl.BlockSpec((Lm1, 1, 3 * H), lambda b, t: (0, 0, 0)),
            pl.BlockSpec((L, 1, 3 * H), lambda b, t: (0, 0, 0)),
        ],
        out_specs=pl.BlockSpec((Tc, Bc, H), lambda b, t: (t, b, 0)),
        scratch_shapes=scratch,
        compiler_params=pltpu.CompilerParams(
            # batch chunks are independent -> v7x's 2 TensorCores; T is sequential.
            dimension_semantics=("parallel", "arbitrary"),
            vmem_limit_bytes=vmem_limit),
    )(gi0, h0, w_ih_rest, w_hh, b_ih_rest, b_hh)


# ------------------------------- decoder forward ---------------------------------

def decoder_forward(params, hidden, target):
    """Teacher-forcing branch of Decoder.forward (target is not None), eval mode."""
    B, T = target.shape
    H = hidden.shape[-1]

    # Choose padding / chunking.  Batch padded to a sublane multiple per chunk so the
    # recurrent (Bc, H) tiles are dense; batch split in 2 when big enough (v7x).
    B_pad = max(8, _round_up(B, 8))
    batch_chunks = 2 if B_pad >= 16 else 1
    B_pad = _round_up(B_pad, 8 * batch_chunks)
    t_chunk = T if T <= 64 else 64
    T_pad = _round_up(T, t_chunk)

    target_p = target if T_pad == T else jnp.pad(target, ((0, 0), (0, T_pad - T)))

    # Embedding lookup is a gather -> plain-JAX glue; gathered directly time-major.
    x_tm = jnp.take(params["embedding"], target_p.T, axis=0)          # (T_pad, B, E)
    if B_pad != B:
        x_tm = jnp.pad(x_tm, ((0, 0), (0, B_pad - B), (0, 0)))
        hidden_p = jnp.pad(hidden, ((0, B_pad - B), (0, 0)))
    else:
        hidden_p = hidden

    # 1) Hoisted layer-0 input projection for ALL timesteps: one tiled MXU matmul.
    #    Activations cast to bf16 in the wrapper (half the HBM bytes into the kernel).
    E = x_tm.shape[-1]
    gi0 = matmul_bias(x_tm.reshape(T_pad * B_pad, E).astype(jnp.bfloat16),
                      params["w_ih0"], params["b_ih0"])
    gi0 = gi0.reshape(T_pad, B_pad, 3 * H)

    # 2) Fused multi-layer GRU recurrence (all layers + time loop, chunked grid),
    #    output time-major (T_pad, B_pad, H) with dense in-kernel stores.
    y_tm = fused_gru(gi0, hidden_p, params["w_ih_rest"], params["w_hh"],
                     params["b_ih_rest"], params["b_hh"],
                     t_chunk=t_chunk, batch_chunks=batch_chunks)
    # TODO(synk): nn.GRU inter-layer dropout / self.dropout only act in training mode;
    # eval-mode semantics (identity) are implemented here.

    # Batch-major plumbing on the small (B, T, H) tensor (plain XLA), then the tiled
    # vocab projection on the real rows only.
    y_bm = jnp.transpose(y_tm, (1, 0, 2))[:B, :T]                      # (B, T, H)
    y2d = y_bm.reshape(B * T, H).astype(jnp.bfloat16)
    logits2d = matmul_bias(y2d, params["w_out"], params["b_out"])
    return logits2d.reshape(B, T, -1)
    # TODO(synk): the free-running (target=None) greedy-decode branch (argmax feedback
    # loop) is not implemented as a Pallas kernel.


# ------------------------------ pure-JAX reference -------------------------------

def decoder_forward_ref(params, hidden, target):
    # NOTE: applies the same bf16 casts at the dot inputs as the kernels, so this
    # validates the kernel plumbing; re-verify vs true-f32 PyTorch at production T.
    B, T = target.shape
    H = hidden.shape[-1]
    L = params["w_hh"].shape[0]
    emb = jnp.take(params["embedding"], target.T, axis=0)              # (T, B, E)

    def run_layer(x_tm, w_ih, b_ih, w_hh, b_hh):
        K = x_tm.shape[-1]
        gi_all = jnp.dot(x_tm.reshape(T * B, K).astype(jnp.bfloat16), w_ih,
                         preferred_element_type=jnp.float32).reshape(T, B, 3 * H) + b_ih

        def step(h, gi_t):
            gh = jnp.dot(h.astype(jnp.bfloat16), w_hh,
                         preferred_element_type=jnp.float32) + b_hh
            r = jax.nn.sigmoid(gi_t[:, :H] + gh[:, :H])
            z = jax.nn.sigmoid(gi_t[:, H:2 * H] + gh[:, H:2 * H])
            n = jnp.tanh(gi_t[:, 2 * H:] + r * gh[:, 2 * H:])
            h_new = (1.0 - z) * n + z * h
            return h_new, h_new

        _, ys = jax.lax.scan(step, hidden, gi_all)
        return ys                                                      # (T, B, H)

    x = emb
    for l in range(L):
        w_ih = params["w_ih0"] if l == 0 else params["w_ih_rest"][l - 1]
        b_ih = params["b_ih0"] if l == 0 else params["b_ih_rest"][l - 1]
        x = run_layer(x, w_ih, b_ih, params["w_hh"][l], params["b_hh"][l])

    y2d = jnp.transpose(x, (1, 0, 2)).reshape(B * T, H)
    logits = jnp.dot(y2d.astype(jnp.bfloat16), params["w_out"],
                     preferred_element_type=jnp.float32) + params["b_out"]
    return logits.reshape(B, T, -1)


# ----------------------------------- params --------------------------------------

def make_params(key, vocab_size, embed_size, hidden_size, num_layers):
    H = hidden_size
    keys = jax.random.split(key, 5 + 4 * num_layers)
    k = 1.0 / (hidden_size ** 0.5)

    def u(kk, shape):
        return jax.random.uniform(kk, shape, jnp.float32, -k, k)

    w_ih, w_hh, b_ih, b_hh = [], [], [], []
    for layer in range(num_layers):
        din = embed_size if layer == 0 else hidden_size
        kk = keys[5 + 4 * layer: 9 + 4 * layer]
        w_ih.append(u(kk[0], (din, 3 * H)))
        w_hh.append(u(kk[1], (H, 3 * H)))
        b_ih.append(u(kk[2], (1, 3 * H)))
        b_hh.append(u(kk[3], (1, 3 * H)))

    if num_layers > 1:
        w_ih_rest = jnp.stack(w_ih[1:])
        b_ih_rest = jnp.stack(b_ih[1:])
    else:  # dummy (never indexed) so the fused kernel signature stays fixed
        w_ih_rest = jnp.zeros((1, H, 3 * H), jnp.float32)
        b_ih_rest = jnp.zeros((1, 1, 3 * H), jnp.float32)

    return {
        # nn.Embedding default init ~ N(0, 1); kept f32 (gather + tiny table)
        "embedding": jax.random.normal(keys[0], (vocab_size, embed_size), jnp.float32),
        # matmul weights stored bf16 (MXU-native); biases stay f32
        "w_ih0": w_ih[0].astype(jnp.bfloat16),
        "b_ih0": b_ih[0],
        "w_ih_rest": w_ih_rest.astype(jnp.bfloat16),
        "b_ih_rest": b_ih_rest,
        "w_hh": jnp.stack(w_hh).astype(jnp.bfloat16),
        "b_hh": jnp.stack(b_hh),
        "w_out": u(keys[1], (hidden_size, vocab_size)).astype(jnp.bfloat16),
        "b_out": u(keys[2], (1, vocab_size)),
    }


# ------------------------------------ main ----------------------------------------

if __name__ == "__main__":
    vocab_size, embed_size, hidden_size, num_layers = 64, 16, 32, 2
    batch, seq_len = 2, 8

    key = jax.random.PRNGKey(0)
    k_params, k_hidden, k_target = jax.random.split(key, 3)

    params = make_params(k_params, vocab_size, embed_size, hidden_size, num_layers)
    hidden = jax.random.normal(k_hidden, (batch, hidden_size), jnp.float32)
    target = jax.random.randint(k_target, (batch, seq_len), 0, vocab_size, jnp.int32)

    logits = jax.block_until_ready(decoder_forward(params, hidden, target))
    ref = jax.block_until_ready(decoder_forward_ref(params, hidden, target))

    assert logits.shape == (batch, seq_len, vocab_size), logits.shape
    assert jnp.allclose(logits, ref, atol=5e-3, rtol=5e-3), \
        float(jnp.max(jnp.abs(logits - ref)))

    print("KERNEL_OK")
</pallas_src>

<mosaic_0001>
module attributes {stable_mosaic.version = 11 : i64} {
  func.func @_matmul_bias_kernel(%arg0: i32, %arg1: i32, %arg2: memref<64x16xbf16, #tpu.memory_space<vmem>>, %arg3: memref<16x128xbf16, #tpu.memory_space<vmem>>, %arg4: memref<1x128xf32, #tpu.memory_space<vmem>>, %arg5: memref<64x128xf32, #tpu.memory_space<vmem>>) attributes {dimension_semantics = [#tpu.dimension_semantics<parallel>, #tpu.dimension_semantics<parallel>], iteration_bounds = array<i64: 1, 1>, scalar_prefetch = 0 : i64, scratch_operands = 0 : i64, tpu.core_type = #tpu.core_type<tc>, window_params = [{transform_indices = @transform_0, window_bounds = array<i64: 64, 16>}, {transform_indices = @transform_1, window_bounds = array<i64: 16, 128>}, {transform_indices = @transform_2, window_bounds = array<i64: 1, 128>}, {transform_indices = @transform_3, window_bounds = array<i64: 64, 128>}]} {
    %c0 = arith.constant 0 : index
    %c0_0 = arith.constant 0 : index
    %0 = vector.load %arg2[%c0, %c0_0] : memref<64x16xbf16, #tpu.memory_space<vmem>>, vector<64x16xbf16>
    %c0_1 = arith.constant 0 : index
    %c0_2 = arith.constant 0 : index
    %1 = vector.load %arg3[%c0_1, %c0_2] : memref<16x128xbf16, #tpu.memory_space<vmem>>, vector<16x128xbf16>
    %cst = arith.constant dense<0.000000e+00> : vector<64x128xf32>
    %2 = tpu.matmul %0, %1, %cst {dimension_numbers = #tpu.dot_dimension_numbers<[1], [0], [0], [1], [0, 0, 1, 1], [], []>} : vector<64x16xbf16>, vector<16x128xbf16>, vector<64x128xf32> -> vector<64x128xf32>
    %c0_3 = arith.constant 0 : index
    %c0_4 = arith.constant 0 : index
    %3 = vector.load %arg4[%c0_3, %c0_4] : memref<1x128xf32, #tpu.memory_space<vmem>>, vector<1x128xf32>
    %4 = vector.broadcast %3 : vector<1x128xf32> to vector<64x128xf32>
    %5 = arith.addf %2, %4 : vector<64x128xf32>
    %c0_5 = arith.constant 0 : index
    %c0_6 = arith.constant 0 : index
    %6 = vector.load %arg5[%c0_5, %c0_6] : memref<64x128xf32, #tpu.memory_space<vmem>>, vector<64x128xf32>
    tpu.vector_store %arg5[%c0_5, %c0_6], %5 {strides = array<i32>} : memref<64x128xf32, #tpu.memory_space<vmem>>, vector<64x128xf32>,
    return
  }
  func.func @transform_0(%arg0: i32, %arg1: i32) -> (i32, i32) {
    %c0_i32 = arith.constant 0 : i32
    %c0_i32_0 = arith.constant 0 : i32
    return %arg0, %c0_i32 : i32, i32
  }
  func.func @transform_1(%arg0: i32, %arg1: i32) -> (i32, i32) {
    %c0_i32 = arith.constant 0 : i32
    %c0_i32_0 = arith.constant 0 : i32
    return %c0_i32, %arg1 : i32, i32
  }
  func.func @transform_2(%arg0: i32, %arg1: i32) -> (i32, i32) {
    %c0_i32 = arith.constant 0 : i32
    %c0_i32_0 = arith.constant 0 : i32
    return %c0_i32, %arg1 : i32, i32
  }
  func.func @transform_3(%arg0: i32, %arg1: i32) -> (i32, i32) {
    %c0_i32 = arith.constant 0 : i32
    return %arg0, %arg1 : i32, i32
  }
}

</mosaic_0001>

<llo_original>
// kernel: tpu_custom_call.1
$region0: #{tpu_custom_call.1}
  #allocation0 [shape = 'u32[]', space=smem, size = 0x4, offset = 0x4, fixed_abs, tag = 'smem constant byte address 0x4 - core index']
  #allocation1 [shape = 'u32[144,128]{1,0:T(1,128)}', space=vmem, size = 0x12000, scoped, tag = 'internal scratch']
  %s0 = inlined_call_operand.vmem [shape: bf16[64,16], index: 0, kind: input, shape index: {}]
  %s1 = inlined_call_operand.vmem [shape: bf16[16,128], index: 1, kind: input, shape index: {}]
  %s2 = inlined_call_operand.vmem [shape: f32[1,128], index: 2, kind: input, shape index: {}]
  %s3 = inlined_call_operand.hbm [shape: f32[64,128], index: 3, kind: output, shape index: {}]
  %s4 = sld [smem:[#allocation0]]
  $region22: #{tpu_custom_call.1} parent=0
    _
  %s6 = ssub.s32 1, %s4
  %s7 = scalar_select 0, %s6, %s4
  $region1: #{tpu_custom_call.1} parent=0
    #allocation2 [shape = 'u8[32768]{0}', space=vmem, size = 0x8000, scoped, tag = 'output window, operand 0, single buffered']
    #allocation3 [shape = 's32[1]{0}', space=sflag, size = 0x4, scoped, tag = 'scoped memory for tpu_custom_call.1']
    %8 = vsyncpa [#allocation3], 0
    // Predicated region
    $region2: #{tpu_custom_call.1} parent=1 // pred_check
      _
    $region3: #{tpu_custom_call.1} parent=1 // pred_check_branch
      %10 = sbr.rel (0) target = $region5
    $region4: #{tpu_custom_call.1} parent=1 // pred_region
      _
    $region5: #{tpu_custom_call.1} parent=1 // pred_fallthru
      _
    // Predicated region
    $region6: #{tpu_custom_call.1} parent=1 // pred_check
      _
    $region7: #{tpu_custom_call.1} parent=1 // pred_check_branch
      %12 = sbr.rel (0) target = $region9
    $region8: #{tpu_custom_call.1} parent=1 // pred_region
      _
    $region9: #{tpu_custom_call.1} parent=1 // pred_fallthru
      _
    // Predicated region
    $region10: #{tpu_custom_call.1} parent=1 // pred_check
      _
    $region11: #{tpu_custom_call.1} parent=1 // pred_check_branch
      %14 = sbr.rel (0) target = $region13
    $region12: #{tpu_custom_call.1} parent=1 // pred_region
      _
    $region13: #{tpu_custom_call.1} parent=1 // pred_fallthru
      _
    %v16 = vld [vmem:[%s0] sm:$0xf]
    %v17 = vld [vmem:[%s0 + $0x4] sm:$0xf]
    %v18 = vld [vmem:[%s0 + $0x8] sm:$0xf]
    %v19 = vld [vmem:[%s0 + $0xc] sm:$0xf]
    %v20 = vld [vmem:[%s0 + $0x10] sm:$0xf]
    %v21 = vld [vmem:[%s0 + $0x14] sm:$0xf]
    %v22 = vld [vmem:[%s0 + $0x18] sm:$0xf]
    %v23 = vld [vmem:[%s0 + $0x1c] sm:$0xf]
    %v24 = vld [vmem:[%s1] sm:$0xf]
    %v25 = vld [vmem:[%s1 + $0x4] sm:$0xf]
    %v26 = vld [vmem:[%s2] sm:$0x1]
    %v28 = vlaneseq
    %v29 = vshrl.u32 %v28, 7
    %v30 = vsub.s32 0, %v29
    %v31 = vrot.slane %v26, %v30
    %v41 = vunpack.c.l.b16 %v16
    %v42 = vunpack.c.l.b16 %v17
    %v43 = vunpack.c.l.b16 %v18
    %v44 = vunpack.c.l.b16 %v19
    %v45 = vunpack.c.l.b16 %v20
    %v46 = vunpack.c.l.b16 %v21
    %v47 = vunpack.c.l.b16 %v22
    %v48 = vunpack.c.l.b16 %v23
    %v49 = vpack.c.b16 %v42, %v41
    %v50 = vpack.c.b16 %v44, %v43
    %v51 = vpack.c.b16 %v46, %v45
    %v52 = vpack.c.b16 %v48, %v47
    %v55 = vunpack.c.l.b16 %v24
    %v56 = vunpack.c.l.b16 %v25
    %v57 = vpack.c.b16 %v56, %v55
    %vm59 = vcmask 130048
    %v61 = vsel %vm59, %v49, 0
    %v64 = vsel %vm59, %v50, 0
    %v67 = vsel %vm59, %v51, 0
    %v70 = vsel %vm59, %v52, 0
    %72 = vmatprep.subr.bf16.mxu0 0
    %73 = vmatpush1.bf16.msra.mxu0 %v57
    %74 = vmatprep.subr.bf16.mxu0 0
    %75 = vmatpush1.bf16.msra.mxu0 0
    %76 = vmatprep.subr.bf16.mxu0 0
    %77 = vmatpush1.bf16.msra.mxu0 0
    %78 = vmatprep.subr.bf16.mxu0 0
    %79 = vmatpush1.bf16.msra.mxu0 0
    %80 = vmatprep.subr.bf16.mxu0 0
    %81 = vmatpush1.bf16.msra.mxu0 0
    %82 = vmatprep.subr.bf16.mxu0 0
    %83 = vmatpush1.bf16.msra.mxu0 0
    %84 = vmatprep.subr.bf16.mxu0 0
    %85 = vmatpush1.bf16.msra.mxu0 0
    %86 = vmatprep.subr.bf16.mxu0 0
    %87 = vmatpush1.bf16.msra.mxu0 0
    %88 = vmatprep.subr.bf16.mxu0 0
    %89 = vmatpush1.bf16.msra.mxu0 0
    %90 = vmatprep.subr.bf16.mxu0 0
    %91 = vmatpush1.bf16.msra.mxu0 0
    %92 = vmatprep.subr.bf16.mxu0 0
    %93 = vmatpush1.bf16.msra.mxu0 0
    %94 = vmatprep.subr.bf16.mxu0 0
    %95 = vmatpush1.bf16.msra.mxu0 0
    %96 = vmatprep.subr.bf16.mxu0 0
    %97 = vmatpush1.bf16.msra.mxu0 0
    %98 = vmatprep.subr.bf16.mxu0 0
    %99 = vmatpush1.bf16.msra.mxu0 0
    %100 = vmatprep.subr.bf16.mxu0 0
    %101 = vmatpush1.bf16.msra.mxu0 0
    %102 = vmatprep.subr.bf16.mxu0 0
    %103 = vmatpush1.bf16.msra.mxu0 0
    %104 = vmatprep.mubr.bf16.mxu0 0
    %105 = vmatmul.mubr.bf16.gmra.mrb[0].mxu0 %v61
    %v106 = vpop.f32.mrb[0].mxu0
    %v107 = vadd.f32 %v31, %v106
    %v108 = vpop.f32.mrb[0].mxu0
    %v109 = vpop.f32.mrb[0].mxu0
    %v110 = vadd.f32 %v31, %v109
    %v111 = vpop.f32.mrb[0].mxu0
    %112 = vmatprep.mubr.bf16.mxu0 0
    %113 = vmatmul.mubr.bf16.gmra.mrb[0].mxu0 %v64
    %v114 = vpop.f32.mrb[0].mxu0
    %v115 = vadd.f32 %v31, %v114
    %v116 = vpop.f32.mrb[0].mxu0
    %v117 = vpop.f32.mrb[0].mxu0
    %v118 = vadd.f32 %v31, %v117
    %v119 = vpop.f32.mrb[0].mxu0
    %120 = vmatprep.mubr.bf16.mxu0 0
    %121 = vmatmul.mubr.bf16.gmra.mrb[0].mxu0 %v67
    %v122 = vpop.f32.mrb[0].mxu0
    %v123 = vadd.f32 %v31, %v122
    %v124 = vpop.f32.mrb[0].mxu0
    %v125 = vpop.f32.mrb[0].mxu0
    %v126 = vadd.f32 %v31, %v125
    %v127 = vpop.f32.mrb[0].mxu0
    %128 = vmatprep.mubr.bf16.mxu0 0
    %129 = vmatmul.mubr.bf16.gmra.mrb[0].mxu0 %v70
    %v130 = vpop.f32.mrb[0].mxu0
    %v131 = vadd.f32 %v31, %v130
    %v132 = vpop.f32.mrb[0].mxu0
    %v133 = vpop.f32.mrb[0].mxu0
    %v134 = vadd.f32 %v31, %v133
    %v135 = vpop.f32.mrb[0].mxu0
    %136 = vdwg.mxu0
    %137 = vst [vmem:[#allocation2] sm:$0xff] %v107
    %138 = vst [vmem:[#allocation2 + $0x8] sm:$0xff] %v110
    %139 = vst [vmem:[#allocation2 + $0x10] sm:$0xff] %v115
    %140 = vst [vmem:[#allocation2 + $0x18] sm:$0xff] %v118
    %141 = vst [vmem:[#allocation2 + $0x20] sm:$0xff] %v123
    %142 = vst [vmem:[#allocation2 + $0x28] sm:$0xff] %v126
    %143 = vst [vmem:[#allocation2 + $0x30] sm:$0xff] %v131
    %144 = vst [vmem:[#allocation2 + $0x38] sm:$0xff] %v134
    // Predicated region
    $region14: #{tpu_custom_call.1} parent=1 // pred_check
      _
    $region15: #{tpu_custom_call.1} parent=1 // pred_check_branch
      %146 = sbr.rel (0) target = $region17
    $region16: #{tpu_custom_call.1} parent=1 // pred_region
      %s148 = ssub.s32 1024, 1024
      %149 = vsyncadd [#allocation3], %s148
      %s150 = sshll.u32 [#allocation2], 4
      %s151 = int_to_ptr.vmem [resolvable:$true] %s150
      %156 = dma.vmem_to_hbm [thread:$0]  %s151, 1024, %s3, [#allocation3], 128, 128, 8
    $region17: #{tpu_custom_call.1} parent=1 // pred_fallthru
      _
    // Predicated region
    $region18: #{tpu_custom_call.1} parent=1 // pred_check
      _
    $region19: #{tpu_custom_call.1} parent=1 // pred_check_branch
      %158 = sbr.rel (0) target = $region21
    $region20: #{tpu_custom_call.1} parent=1 // pred_region
      %159 = dma.done [#allocation3], 1024
    $region21: #{tpu_custom_call.1} parent=1 // pred_fallthru
      _
    %160 = vsyncpa [#allocation3], 1

</llo_original>
